<compile_context>
chip_gen: v7x
topology: tpu7x:2x2x1
jax: 0.10.0
libtpu: 0.0.40
codegen_flags: <defaults>
</compile_context>

<pallas_src>
import functools
import math

import jax
import jax.numpy as jnp
from jax.experimental import pallas as pl
from jax.experimental.pallas import tpu as pltpu


def _timestep_embed_kernel(half, merged_dot, t_ref, freqs_ref, w1_ref, b1_ref,
                           w2_ref, b2_ref, o_ref):
    t = t_ref[...].astype(jnp.float32)            # (TILE_N, 1)
    freqs = freqs_ref[...]                        # (1, half) f32
    args = t * freqs                              # (TILE_N, half)
    cos = jnp.cos(args)
    sin = jnp.sin(args)

    if merged_dot:
        # half % 128 == 0: the concat is pure vreg placement (lane blocks
        # already line up) and the single K=2*half contraction uses the
        # 256-wide MXU of v6e/v7x in one pass.
        emb = jnp.concatenate([cos, sin], axis=-1)          # (TILE_N, 2*half)
        h = jnp.dot(emb, w1_ref[...], preferred_element_type=jnp.float32)
    else:
        # Fallback for non-lane-aligned half: split over the [cos | sin] halves
        # via static ref slices (no cross-lane concat, no (N, E) intermediate).
        h = (jnp.dot(cos, w1_ref[:half, :], preferred_element_type=jnp.float32)
             + jnp.dot(sin, w1_ref[half:2 * half, :],
                       preferred_element_type=jnp.float32))

    h = h + b1_ref[...].astype(jnp.float32)
    h = h * jax.nn.sigmoid(h)                     # SiLU (f32 EUP path)

    out = (jnp.dot(h, w2_ref[...], preferred_element_type=jnp.float32)
           + b2_ref[...].astype(jnp.float32))
    o_ref[...] = out.astype(o_ref.dtype)


def _round_up(x, m):
    return ((x + m - 1) // m) * m


def diffusion_timestep_embedding(t, w1, b1, w2, b2, *,
                                 timestep_embedding_size=256,
                                 max_period=10000,
                                 max_tile_n=1024):
    """t: (N,) float timesteps. Returns (N, out_features) float32.

    w1: (E, O), b1: (O,), w2: (O, O), b2: (O,) -- PyTorch Linear weights
    stored transposed (in_features x out_features), any float dtype.
    """
    n = t.shape[0]
    e = timestep_embedding_size
    half = e // 2
    out_features = w2.shape[1]
    assert w1.shape[0] == e, "w1 must have timestep_embedding_size rows (in x out)"
    assert w1.shape[1] == out_features and w2.shape[0] == out_features

    # Odd-E zero-pad column multiplies a zero activation -> only the first
    # 2*half rows of w1 matter.
    if e % 2:
        w1 = w1[: 2 * half]

    # Constant, data-independent frequency table (glue).
    freqs = jnp.exp(
        -math.log(max_period) * jnp.arange(half, dtype=jnp.float32) / half
    ).reshape(1, half)

    # Lane-dense N tiling: pick the largest tile (<= max_tile_n) and pad N to a
    # multiple of it.  Weights are held VMEM-resident (constant index_map);
    # only t and the output stream per grid step.
    tile_n = min(max_tile_n, _round_up(n, 8))
    n_pad = _round_up(n, tile_n)
    t2d = t.astype(jnp.float32).reshape(n, 1)
    if n_pad != n:
        t2d = jnp.pad(t2d, ((0, n_pad - n), (0, 0)))

    # No wrapper-side dtype upcasts: pass weights/biases through as stored.
    b1_2d = b1.reshape(1, out_features)
    b2_2d = b2.reshape(1, out_features)

    grid = (n_pad // tile_n,)
    merged_dot = (half > 0) and (half % 128 == 0)
    kernel = functools.partial(_timestep_embed_kernel, half, merged_dot)

    # Advisory cost so XLA schedules this call sensibly.
    w_bytes = (w1.dtype.itemsize * w1.size + b1.dtype.itemsize * b1.size
               + w2.dtype.itemsize * w2.size + b2.dtype.itemsize * b2.size)
    flops = 2 * n_pad * (2 * half * out_features + out_features * out_features)
    transcendentals = n_pad * (2 * half + out_features)      # cos + sin + sigmoid
    bytes_accessed = 4 * (n_pad + half + n_pad * out_features) + w_bytes

    out = pl.pallas_call(
        kernel,
        out_shape=jax.ShapeDtypeStruct((n_pad, out_features), jnp.float32),
        grid_spec=pltpu.PrefetchScalarGridSpec(
            num_scalar_prefetch=0,
            grid=grid,
            in_specs=[
                pl.BlockSpec((tile_n, 1), lambda i: (i, 0)),                 # t
                pl.BlockSpec((1, half), lambda i: (0, 0)),                   # freqs
                pl.BlockSpec((2 * half, out_features), lambda i: (0, 0)),    # w1
                pl.BlockSpec((1, out_features), lambda i: (0, 0)),           # b1
                pl.BlockSpec((out_features, out_features), lambda i: (0, 0)),  # w2
                pl.BlockSpec((1, out_features), lambda i: (0, 0)),           # b2
            ],
            out_specs=pl.BlockSpec((tile_n, out_features), lambda i: (i, 0)),
        ),
        compiler_params=pltpu.CompilerParams(
            dimension_semantics=("parallel",)),
        cost_estimate=pl.CostEstimate(
            flops=flops,
            transcendentals=transcendentals,
            bytes_accessed=bytes_accessed,
        ),
    )(t2d, freqs, w1, b1_2d, w2, b2_2d)

    return out[:n] if n_pad != n else out


def _reference(t, w1, b1, w2, b2, timestep_embedding_size=256, max_period=10000):
    """Pure-JAX mirror of the PyTorch module (incl. odd-E zero padding)."""
    e = timestep_embedding_size
    half = e // 2
    freqs = jnp.exp(-math.log(max_period) * jnp.arange(half, dtype=jnp.float32) / half)
    args = t.astype(jnp.float32)[:, None] * freqs[None]
    emb = jnp.concatenate([jnp.cos(args), jnp.sin(args)], axis=-1)
    if e % 2:
        emb = jnp.concatenate([emb, jnp.zeros_like(emb[:, :1])], axis=-1)
    h = emb @ w1 + b1
    h = h * jax.nn.sigmoid(h)
    return h @ w2 + b2


if __name__ == "__main__":
    E = 256      # timestep_embedding_size (module default)
    O = 128      # out_features

    key = jax.random.PRNGKey(0)
    k_t, k_w1, k_b1, k_w2, k_b2 = jax.random.split(key, 5)

    # PyTorch Linear weights transposed to (in x out).
    w1 = jax.random.normal(k_w1, (E, O), dtype=jnp.float32) * (1.0 / math.sqrt(E))
    b1 = jax.random.normal(k_b1, (O,), dtype=jnp.float32) * 0.01
    w2 = jax.random.normal(k_w2, (O, O), dtype=jnp.float32) * (1.0 / math.sqrt(O))
    b2 = jax.random.normal(k_b2, (O,), dtype=jnp.float32) * 0.01

    # Case 1: small batch (grid degenerates to a single step).
    N = 8
    t = jax.random.uniform(k_t, (N,), dtype=jnp.float32) * 1000.0
    out = diffusion_timestep_embedding(t, w1, b1, w2, b2, timestep_embedding_size=E)
    out = jax.block_until_ready(out)
    ref = _reference(t, w1, b1, w2, b2, timestep_embedding_size=E)
    assert out.shape == (N, O)
    assert jnp.allclose(out, ref, atol=1e-4, rtol=1e-4), "mismatch vs reference (N=8)"

    # Case 2: non-divisible batch with a multi-step parallel grid
    # (exercises N padding + resident-weight BlockSpecs).
    N2 = 300
    t2 = jax.random.uniform(k_t, (N2,), dtype=jnp.float32) * 1000.0
    out2 = diffusion_timestep_embedding(t2, w1, b1, w2, b2,
                                        timestep_embedding_size=E, max_tile_n=128)
    out2 = jax.block_until_ready(out2)
    ref2 = _reference(t2, w1, b1, w2, b2, timestep_embedding_size=E)
    assert out2.shape == (N2, O)
    assert jnp.allclose(out2, ref2, atol=1e-4, rtol=1e-4), "mismatch vs reference (N=300)"

    print("KERNEL_OK")
</pallas_src>

<mosaic_0001>
module attributes {stable_mosaic.version = 11 : i64} {
  func.func @_timestep_embed_kernel(%arg0: i32, %arg1: memref<8x1xf32, #tpu.memory_space<vmem>>, %arg2: memref<1x128xf32, #tpu.memory_space<vmem>>, %arg3: memref<256x128xf32, #tpu.memory_space<vmem>>, %arg4: memref<1x128xf32, #tpu.memory_space<vmem>>, %arg5: memref<128x128xf32, #tpu.memory_space<vmem>>, %arg6: memref<1x128xf32, #tpu.memory_space<vmem>>, %arg7: memref<8x128xf32, #tpu.memory_space<vmem>>) attributes {dimension_semantics = [#tpu.dimension_semantics<parallel>], iteration_bounds = array<i64: 1>, scalar_prefetch = 0 : i64, scratch_operands = 0 : i64, tpu.core_type = #tpu.core_type<tc>, window_params = [{transform_indices = @transform_0, window_bounds = array<i64: 8, 1>}, {pipeline_mode = #tpu.pipeline_mode<synchronous>, transform_indices = @transform_1, window_bounds = array<i64: 1, 128>}, {pipeline_mode = #tpu.pipeline_mode<synchronous>, transform_indices = @transform_2, window_bounds = array<i64: 256, 128>}, {pipeline_mode = #tpu.pipeline_mode<synchronous>, transform_indices = @transform_3, window_bounds = array<i64: 1, 128>}, {pipeline_mode = #tpu.pipeline_mode<synchronous>, transform_indices = @transform_4, window_bounds = array<i64: 128, 128>}, {pipeline_mode = #tpu.pipeline_mode<synchronous>, transform_indices = @transform_5, window_bounds = array<i64: 1, 128>}, {transform_indices = @transform_6, window_bounds = array<i64: 8, 128>}]} {
    %c0 = arith.constant 0 : index
    %c0_0 = arith.constant 0 : index
    %0 = vector.load %arg1[%c0, %c0_0] : memref<8x1xf32, #tpu.memory_space<vmem>>, vector<8x1xf32>
    %c0_1 = arith.constant 0 : index
    %c0_2 = arith.constant 0 : index
    %1 = vector.load %arg2[%c0_1, %c0_2] : memref<1x128xf32, #tpu.memory_space<vmem>>, vector<1x128xf32>
    %2 = vector.broadcast %0 : vector<8x1xf32> to vector<8x128xf32>
    %3 = vector.broadcast %1 : vector<1x128xf32> to vector<8x128xf32>
    %4 = arith.mulf %2, %3 : vector<8x128xf32>
    %5 = math.cos %4 : vector<8x128xf32>
    %6 = math.sin %4 : vector<8x128xf32>
    %7 = tpu.concatenate %5, %6 in 1 : vector<8x128xf32>, vector<8x128xf32> -> vector<8x256xf32>
    %c0_3 = arith.constant 0 : index
    %c0_4 = arith.constant 0 : index
    %8 = vector.load %arg3[%c0_3, %c0_4] : memref<256x128xf32, #tpu.memory_space<vmem>>, vector<256x128xf32>
    %cst = arith.constant dense<0.000000e+00> : vector<8x128xf32>
    %9 = tpu.matmul %7, %8, %cst {dimension_numbers = #tpu.dot_dimension_numbers<[1], [0], [0], [1], [0, 0, 1, 1], [], []>} : vector<8x256xf32>, vector<256x128xf32>, vector<8x128xf32> -> vector<8x128xf32>
    %c0_5 = arith.constant 0 : index
    %c0_6 = arith.constant 0 : index
    %10 = vector.load %arg4[%c0_5, %c0_6] : memref<1x128xf32, #tpu.memory_space<vmem>>, vector<1x128xf32>
    %11 = vector.broadcast %10 : vector<1x128xf32> to vector<8x128xf32>
    %12 = arith.addf %9, %11 : vector<8x128xf32>
    %13 = arith.negf %12 : vector<8x128xf32>
    %14 = math.exp %13 : vector<8x128xf32>
    %cst_7 = arith.constant 1.000000e+00 : f32
    %15 = vector.broadcast %cst_7 : f32 to vector<8x128xf32>
    %16 = arith.addf %15, %14 : vector<8x128xf32>
    %17 = arith.divf %15, %16 : vector<8x128xf32>
    %18 = arith.mulf %12, %17 : vector<8x128xf32>
    %c0_8 = arith.constant 0 : index
    %c0_9 = arith.constant 0 : index
    %19 = vector.load %arg5[%c0_8, %c0_9] : memref<128x128xf32, #tpu.memory_space<vmem>>, vector<128x128xf32>
    %cst_10 = arith.constant dense<0.000000e+00> : vector<8x128xf32>
    %20 = tpu.matmul %18, %19, %cst_10 {dimension_numbers = #tpu.dot_dimension_numbers<[1], [0], [0], [1], [0, 0, 1, 1], [], []>} : vector<8x128xf32>, vector<128x128xf32>, vector<8x128xf32> -> vector<8x128xf32>
    %c0_11 = arith.constant 0 : index
    %c0_12 = arith.constant 0 : index
    %21 = vector.load %arg6[%c0_11, %c0_12] : memref<1x128xf32, #tpu.memory_space<vmem>>, vector<1x128xf32>
    %22 = vector.broadcast %21 : vector<1x128xf32> to vector<8x128xf32>
    %23 = arith.addf %20, %22 : vector<8x128xf32>
    %c0_13 = arith.constant 0 : index
    %c0_14 = arith.constant 0 : index
    %24 = vector.load %arg7[%c0_13, %c0_14] : memref<8x128xf32, #tpu.memory_space<vmem>>, vector<8x128xf32>
    tpu.vector_store %arg7[%c0_13, %c0_14], %23 {strides = array<i32>} : memref<8x128xf32, #tpu.memory_space<vmem>>, vector<8x128xf32>,
    return
  }
  func.func @transform_0(%arg0: i32) -> (i32, i32) {
    %c0_i32 = arith.constant 0 : i32
    %c0_i32_0 = arith.constant 0 : i32
    return %arg0, %c0_i32 : i32, i32
  }
  func.func @transform_1(%arg0: i32) -> (i32, i32) {
    %c0_i32 = arith.constant 0 : i32
    %c0_i32_0 = arith.constant 0 : i32
    %c0_i32_1 = arith.constant 0 : i32
    return %c0_i32, %c0_i32_0 : i32, i32
  }
  func.func @transform_2(%arg0: i32) -> (i32, i32) {
    %c0_i32 = arith.constant 0 : i32
    %c0_i32_0 = arith.constant 0 : i32
    %c0_i32_1 = arith.constant 0 : i32
    return %c0_i32, %c0_i32_0 : i32, i32
  }
  func.func @transform_3(%arg0: i32) -> (i32, i32) {
    %c0_i32 = arith.constant 0 : i32
    %c0_i32_0 = arith.constant 0 : i32
    %c0_i32_1 = arith.constant 0 : i32
    return %c0_i32, %c0_i32_0 : i32, i32
  }
  func.func @transform_4(%arg0: i32) -> (i32, i32) {
    %c0_i32 = arith.constant 0 : i32
    %c0_i32_0 = arith.constant 0 : i32
    %c0_i32_1 = arith.constant 0 : i32
    return %c0_i32, %c0_i32_0 : i32, i32
  }
  func.func @transform_5(%arg0: i32) -> (i32, i32) {
    %c0_i32 = arith.constant 0 : i32
    %c0_i32_0 = arith.constant 0 : i32
    %c0_i32_1 = arith.constant 0 : i32
    return %c0_i32, %c0_i32_0 : i32, i32
  }
  func.func @transform_6(%arg0: i32) -> (i32, i32) {
    %c0_i32 = arith.constant 0 : i32
    %c0_i32_0 = arith.constant 0 : i32
    return %arg0, %c0_i32 : i32, i32
  }
}

</mosaic_0001>

<llo_original>
// kernel: tpu_custom_call.1
$region0: #{tpu_custom_call.1}
  #allocation0 [shape = 'u32[]', space=smem, size = 0x4, offset = 0x4, fixed_abs, tag = 'smem constant byte address 0x4 - core index']
  #allocation1 [shape = 'u32[144,128]{1,0:T(1,128)}', space=vmem, size = 0x12000, scoped, tag = 'internal scratch']
  %s0 = inlined_call_operand.vmem [shape: f32[8,1], index: 0, kind: input, shape index: {}]
  %s1 = inlined_call_operand.vmem [shape: f32[1,128], index: 1, kind: input, shape index: {}]
  %s2 = inlined_call_operand.hbm [shape: f32[256,128], index: 2, kind: input, shape index: {}]
  %s3 = inlined_call_operand.vmem [shape: f32[1,128], index: 3, kind: input, shape index: {}]
  %s4 = inlined_call_operand.hbm [shape: f32[128,128], index: 4, kind: input, shape index: {}]
  %s5 = inlined_call_operand.vmem [shape: f32[1,128], index: 5, kind: input, shape index: {}]
  %s6 = inlined_call_operand.hbm [shape: f32[8,128], index: 6, kind: output, shape index: {}]
  %s7 = sld [smem:[#allocation0]]
  $region42: #{tpu_custom_call.1} parent=0
    _
  %s9 = ssub.s32 1, %s7
  %s10 = scalar_select 0, %s9, %s7
  $region1: #{tpu_custom_call.1} parent=0
    #allocation2 [shape = 'u8[131072]{0}', space=vmem, size = 0x20000, scoped, tag = 'input window, operand 2, single buffered']
    #allocation3 [shape = 's32[1]{0}', space=sflag, size = 0x4, scoped, tag = 'scoped memory for tpu_custom_call.1']
    #allocation4 [shape = 's32[1]{0}', space=sflag, size = 0x4, scoped, tag = 'scoped memory for tpu_custom_call.1']
    #allocation5 [shape = 'u8[65536]{0}', space=vmem, size = 0x10000, scoped, tag = 'input window, operand 4, single buffered']
    #allocation6 [shape = 's32[1]{0}', space=sflag, size = 0x4, scoped, tag = 'scoped memory for tpu_custom_call.1']
    #allocation7 [shape = 'u8[4096]{0}', space=vmem, size = 0x1000, scoped, tag = 'output window, operand 0, single buffered']
    %11 = vsyncpa [#allocation3], 0
    %12 = vsyncpa [#allocation6], 0
    %13 = vsyncpa [#allocation4], 0
    // Predicated region
    $region2: #{tpu_custom_call.1} parent=1 // pred_check
      _
    $region3: #{tpu_custom_call.1} parent=1 // pred_check_branch
      %15 = sbr.rel (0) target = $region5
    $region4: #{tpu_custom_call.1} parent=1 // pred_region
      _
    $region5: #{tpu_custom_call.1} parent=1 // pred_fallthru
      _
    // Predicated region
    $region6: #{tpu_custom_call.1} parent=1 // pred_check
      _
    $region7: #{tpu_custom_call.1} parent=1 // pred_check_branch
      %17 = sbr.rel (0) target = $region9
    $region8: #{tpu_custom_call.1} parent=1 // pred_region
      _
    $region9: #{tpu_custom_call.1} parent=1 // pred_fallthru
      _
    // Predicated region
    $region10: #{tpu_custom_call.1} parent=1 // pred_check
      _
    $region11: #{tpu_custom_call.1} parent=1 // pred_check_branch
      %19 = sbr.rel (0) target = $region13
    $region12: #{tpu_custom_call.1} parent=1 // pred_region
      %s21 = ssub.s32 4096, 4096
      %22 = vsyncadd [#allocation3], %s21
      %s23 = sshll.u32 [#allocation2], 4
      %s24 = int_to_ptr.vmem [resolvable:$true] %s23
      %29 = dma.hbm_to_vmem [thread:$0]  %s2, 4096, %s24, [#allocation3], 128, 128, 8
    $region13: #{tpu_custom_call.1} parent=1 // pred_fallthru
      _
    // Predicated region
    $region14: #{tpu_custom_call.1} parent=1 // pred_check
      _
    $region15: #{tpu_custom_call.1} parent=1 // pred_check_branch
      %31 = sbr.rel (0) target = $region17
    $region16: #{tpu_custom_call.1} parent=1 // pred_region
      _
    $region17: #{tpu_custom_call.1} parent=1 // pred_fallthru
      _
    // Predicated region
    $region18: #{tpu_custom_call.1} parent=1 // pred_check
      _
    $region19: #{tpu_custom_call.1} parent=1 // pred_check_branch
      %33 = sbr.rel (0) target = $region21
    $region20: #{tpu_custom_call.1} parent=1 // pred_region
      %s35 = ssub.s32 2048, 2048
      %36 = vsyncadd [#allocation6], %s35
      %s37 = sshll.u32 [#allocation5], 4
      %s38 = int_to_ptr.vmem [resolvable:$true] %s37
      %43 = dma.hbm_to_vmem [thread:$0]  %s4, 2048, %s38, [#allocation6], 128, 128, 8
    $region21: #{tpu_custom_call.1} parent=1 // pred_fallthru
      _
    // Predicated region
    $region22: #{tpu_custom_call.1} parent=1 // pred_check
      _
    $region23: #{tpu_custom_call.1} parent=1 // pred_check_branch
      %45 = sbr.rel (0) target = $region25
    $region24: #{tpu_custom_call.1} parent=1 // pred_region
      _
    $region25: #{tpu_custom_call.1} parent=1 // pred_fallthru
      _
    // Predicated region
    $region26: #{tpu_custom_call.1} parent=1 // pred_check
      _
    $region27: #{tpu_custom_call.1} parent=1 // pred_check_branch
      %47 = sbr.rel (0) target = $region29
    $region28: #{tpu_custom_call.1} parent=1 // pred_region
      %48 = dma.done [#allocation3], 4096
    $region29: #{tpu_custom_call.1} parent=1 // pred_fallthru
      _
    // Predicated region
    $region30: #{tpu_custom_call.1} parent=1 // pred_check
      _
    $region31: #{tpu_custom_call.1} parent=1 // pred_check_branch
      %50 = sbr.rel (0) target = $region33
    $region32: #{tpu_custom_call.1} parent=1 // pred_region
      %51 = dma.done [#allocation6], 2048
    $region33: #{tpu_custom_call.1} parent=1 // pred_fallthru
      _
    %v52 = vld [vmem:[%s0] sm:$0xff]
    %v53 = vld [vmem:[%s1] sm:$0x1]
    %55 = vset.pattern.permute.xlu0 0
    %56 = vperm.xlu0 %55, %v52
    %v57 = vpop.permute.xlu0 %56
    %v60 = vlaneseq
    %v61 = vshrl.u32 %v60, 7
    %v62 = vsub.s32 0, %v61
    %v63 = vrot.slane %v53, %v62
    %v65 = vmul.f32 %v57, %v63
    %v66 = vand.u32 2147483647, %v65
    %vm67 = vcmp.le.f32.partialorder %v66, 0.7853982
    %vm68 = vcmp.lt.s32.totalorder %v65, 0
    %v69 = vand.u32 %v65, 2139095040
    %v70 = vshrl.u32 %v69, 23
    %v71 = vsub.s32 %v70, 127
    %v72 = vand.u32 2147483647, %v65
    %v73 = vand.u32 %v72, 8388607
    %v74 = vor.u32 %v73, 8388608
    %v75 = vsub.s32 0, %v74
    %v76 = vadd.s32 %v71, 1
    %vm77 = vcmp.gt.s32.totalorder %v76, 0
    %v78 = vsel %vm77, %v76, 0
    %v79 = vshrl.u32 %v78, 5
    %v80 = vand.u32 %v78, 31
    %v81 = vsub.s32 32, %v80
    %v82 = vshrl.u32 683565275, %v81
    %v83 = vshll.u32 683565275, %v80
    %v84 = vshrl.u32 2475754826, %v81
    %v85 = vor.u32 %v83, %v84
    %v86 = vshll.u32 2475754826, %v80
    %v87 = vshrl.u32 2131351028, %v81
    %v88 = vor.u32 %v86, %v87
    %v89 = vshll.u32 2131351028, %v80
    %v90 = vshrl.u32 2102212464, %v81
    %v91 = vor.u32 %v89, %v90
    %v92 = vshll.u32 2102212464, %v80
    %v93 = vshrl.u32 920167782, %v81
    %v94 = vor.u32 %v92, %v93
    %v95 = vshll.u32 920167782, %v80
    %v96 = vshrl.u32 1326507024, %v81
    %v97 = vor.u32 %v95, %v96
    %vm98 = vcmp.lt.s32.totalorder %v79, 1
    %vm99 = vcmp.lt.s32.totalorder %v79, 2
    %vm100 = vcmp.lt.s32.totalorder %v79, 3
    %vm101 = vcmp.lt.s32.totalorder %v79, 4
    %v102 = vsel %vm98, %v82, %v85
    %v103 = vsel %vm101, %v91, 2102212464
    %v104 = vsel %vm100, %v88, %v103
    %v105 = vsel %vm99, %v102, %v104
    %v106 = vsel %vm98, %v85, %v88
    %v107 = vsel %vm101, %v94, 920167782
    %v108 = vsel %vm100, %v91, %v107
    %v109 = vsel %vm99, %v106, %v108
    %v110 = vsel %vm98, %v88, %v91
    %v111 = vsel %vm101, %v97, 1326507024
    %v112 = vsel %vm100, %v94, %v111
    %v113 = vsel %vm99, %v110, %v112
    %v114 = vshll.u32 %v74, 8
    %v115 = vmul.u32.u64.compose %v114, %v113
    %v116 = vextract.low.u32 %v115
    %v117 = vextract.high.u32 %v115
    %v118 = vmul.u32.u64.compose %v114, %v109
    %v119 = vextract.low.u32 %v118
    %v120 = vextract.high.u32 %v118
    %v121 = vmul.u32 %v114, %v105
    %v122 = vadd.s32 %v117, %v119
    %vm123 = vc.u32 %v117, %v119
    %v124 = vadd.s32 %v120, 1
    %v125 = vsel %vm123, %v124, %v120
    %v126 = vadd.s32 %v121, %v125
    %v127 = vadd.s32 %v126, 536870912
    %v128 = vshrl.u32 %v127, 30
    %v129 = vshll.u32 %v128, 30
    %v130 = vsub.s32 %v126, %v129
    %vm131 = vcmp.lt.s32.totalorder %v130, 0
    %v132 = vsub.s32 0, %v130
    %v133 = vsel %vm131, %v132, %v130
    %v134 = vclz %v133
    %v135 = vsub.s32 %v134, 2
    %vm136 = vcmp.gt.s32.totalorder 0, %v135
    %v137 = vsel %vm136, 0, %v135
    %v138 = vsub.s32 32, %v137
    %v139 = vshll.u32 %v130, %v137
    %v140 = vshrl.u32 %v122, %v138
    %v141 = vor.u32 %v139, %v140
    %v142 = vsub.s32 4294967266, %v137
    %v143 = vadd.s32 %v142, 127
    %v144 = vshll.u32 %v143, 23
    %v145 = vor.u32 4788187, %v144
    %v146 = vand.u32 2147483647, %v145
    %v148 = vcvt.s32.f32 %v141
    %v149 = vmul.f32 %v148, %v146
    %v150 = vxor.u32 %v149, 2147483648
    %v151 = vsel %vm68, %v150, %v149
    %v152 = vsub.s32 4, %v128
    %v153 = vsel %vm68, %v152, %v128
    %v154 = vsel %vm67, %v65, %v151
    %v155 = vsel %vm67, 0, %v153
    %v156 = vcosq.f32.pop %v154
    %v157 = vsinq.f32.pop %v154
    %vm158 = vweird.f32 %v65
    %v159 = vand.u32 %v155, 3
    %vm160 = vcmp.lt.s32.totalorder %v159, 2
    %vm161 = vcmp.eq.s32.totalorder %v159, 0
    %v162 = vxor.u32 %v157, 2147483648
    %v163 = vsel %vm161, %v156, %v162
    %vm164 = vcmp.eq.s32.totalorder %v159, 2
    %v165 = vxor.u32 %v156, 2147483648
    %v166 = vsel %vm164, %v165, %v157
    %v167 = vsel %vm160, %v163, %v166
    %v168 = vsel %vm158, nan, %v167
    %v169 = vand.u32 2147483647, %v65
    %vm170 = vcmp.le.f32.partialorder %v169, 0.7853982
    %vm171 = vcmp.lt.s32.totalorder %v65, 0
    %v172 = vand.u32 %v65, 2139095040
    %v173 = vshrl.u32 %v172, 23
    %v174 = vsub.s32 %v173, 127
    %v175 = vand.u32 2147483647, %v65
    %v176 = vand.u32 %v175, 8388607
    %v177 = vor.u32 %v176, 8388608
    %v178 = vsub.s32 0, %v177
    %v179 = vadd.s32 %v174, 1
    %vm180 = vcmp.gt.s32.totalorder %v179, 0
    %v181 = vsel %vm180, %v179, 0
    %v182 = vshrl.u32 %v181, 5
    %v183 = vand.u32 %v181, 31
    %v184 = vsub.s32 32, %v183
    %v185 = vshrl.u32 683565275, %v184
    %v186 = vshll.u32 683565275, %v183
    %v187 = vshrl.u32 2475754826, %v184
    %v188 = vor.u32 %v186, %v187
    %v189 = vshll.u32 2475754826, %v183
    %v190 = vshrl.u32 2131351028, %v184
    %v191 = vor.u32 %v189, %v190
    %v192 = vshll.u32 2131351028, %v183
    %v193 = vshrl.u32 2102212464, %v184
    %v194 = vor.u32 %v192, %v193
    %v195 = vshll.u32 2102212464, %v183
    %v196 = vshrl.u32 920167782, %v184
    %v197 = vor.u32 %v195, %v196
    %v198 = vshll.u32 920167782, %v183
    %v199 = vshrl.u32 1326507024, %v184
    %v200 = vor.u32 %v198, %v199
    %vm201 = vcmp.lt.s32.totalorder %v182, 1
    %vm202 = vcmp.lt.s32.totalorder %v182, 2
    %vm203 = vcmp.lt.s32.totalorder %v182, 3
    %vm204 = vcmp.lt.s32.totalorder %v182, 4
    %v205 = vsel %vm201, %v185, %v188
    %v206 = vsel %vm204, %v194, 2102212464
    %v207 = vsel %vm203, %v191, %v206
    %v208 = vsel %vm202, %v205, %v207
    %v209 = vsel %vm201, %v188, %v191
    %v210 = vsel %vm204, %v197, 920167782
    %v211 = vsel %vm203, %v194, %v210
    %v212 = vsel %vm202, %v209, %v211
    %v213 = vsel %vm201, %v191, %v194
    %v214 = vsel %vm204, %v200, 1326507024
    %v215 = vsel %vm203, %v197, %v214
    %v216 = vsel %vm202, %v213, %v215
    %v217 = vshll.u32 %v177, 8
    %v218 = vmul.u32.u64.compose %v217, %v216
    %v219 = vextract.low.u32 %v218
    %v220 = vextract.high.u32 %v218
    %v221 = vmul.u32.u64.compose %v217, %v212
    %v222 = vextract.low.u32 %v221
    %v223 = vextract.high.u32 %v221
    %v224 = vmul.u32 %v217, %v208
    %v225 = vadd.s32 %v220, %v222
    %vm226 = vc.u32 %v220, %v222
    %v227 = vadd.s32 %v223, 1
    %v228 = vsel %vm226, %v227, %v223
    %v229 = vadd.s32 %v224, %v228
    %v230 = vadd.s32 %v229, 536870912
    %v231 = vshrl.u32 %v230, 30
    %v232 = vshll.u32 %v231, 30
    %v233 = vsub.s32 %v229, %v232
    %vm234 = vcmp.lt.s32.totalorder %v233, 0
    %v235 = vsub.s32 0, %v233
    %v236 = vsel %vm234, %v235, %v233
    %v237 = vclz %v236
    %v238 = vsub.s32 %v237, 2
    %vm239 = vcmp.gt.s32.totalorder 0, %v238
    %v240 = vsel %vm239, 0, %v238
    %v241 = vsub.s32 32, %v240
    %v242 = vshll.u32 %v233, %v240
    %v243 = vshrl.u32 %v225, %v241
    %v244 = vor.u32 %v242, %v243
    %v245 = vsub.s32 4294967266, %v240
    %v246 = vadd.s32 %v245, 127
    %v247 = vshll.u32 %v246, 23
    %v248 = vor.u32 4788187, %v247
    %v249 = vand.u32 2147483647, %v248
    %v251 = vcvt.s32.f32 %v244
    %v252 = vmul.f32 %v251, %v249
    %v253 = vxor.u32 %v252, 2147483648
    %v254 = vsel %vm171, %v253, %v252
    %v255 = vsub.s32 4, %v231
    %v256 = vsel %vm171, %v255, %v231
    %v257 = vsel %vm170, %v65, %v254
    %v258 = vsel %vm170, 0, %v256
    %v259 = vcosq.f32.pop %v257
    %v260 = vsinq.f32.pop %v257
    %vm261 = vweird.f32 %v65
    %v262 = vadd.s32 %v258, 3
    %v263 = vand.u32 %v262, 3
    %vm264 = vcmp.lt.s32.totalorder %v263, 2
    %vm265 = vcmp.eq.s32.totalorder %v263, 0
    %v266 = vxor.u32 %v260, 2147483648
    %v267 = vsel %vm265, %v259, %v266
    %vm268 = vcmp.eq.s32.totalorder %v263, 2
    %v269 = vxor.u32 %v259, 2147483648
    %v270 = vsel %vm268, %v269, %v260
    %v271 = vsel %vm264, %v267, %v270
    %v272 = vsel %vm261, nan, %v271
    %v273 = vld [vmem:[#allocation2] sm:$0xff]
    %v274 = vld [vmem:[#allocation2 + $0x8] sm:$0xff]
    %v275 = vld [vmem:[#allocation2 + $0x10] sm:$0xff]
    %v276 = vld [vmem:[#allocation2 + $0x18] sm:$0xff]
    %v277 = vld [vmem:[#allocation2 + $0x20] sm:$0xff]
    %v278 = vld [vmem:[#allocation2 + $0x28] sm:$0xff]
    %v279 = vld [vmem:[#allocation2 + $0x30] sm:$0xff]
    %v280 = vld [vmem:[#allocation2 + $0x38] sm:$0xff]
    %v281 = vld [vmem:[#allocation2 + $0x40] sm:$0xff]
    %v282 = vld [vmem:[#allocation2 + $0x48] sm:$0xff]
    %v283 = vld [vmem:[#allocation2 + $0x50] sm:$0xff]
    %v284 = vld [vmem:[#allocation2 + $0x58] sm:$0xff]
    %v285 = vld [vmem:[#allocation2 + $0x60] sm:$0xff]
    %v286 = vld [vmem:[#allocation2 + $0x68] sm:$0xff]
    %v287 = vld [vmem:[#allocation2 + $0x70] sm:$0xff]
    %v288 = vld [vmem:[#allocation2 + $0x78] sm:$0xff]
    %v289 = vld [vmem:[#allocation2 + $0x80] sm:$0xff]
    %v290 = vld [vmem:[#allocation2 + $0x88] sm:$0xff]
    %v291 = vld [vmem:[#allocation2 + $0x90] sm:$0xff]
    %v292 = vld [vmem:[#allocation2 + $0x98] sm:$0xff]
    %v293 = vld [vmem:[#allocation2 + $0xa0] sm:$0xff]
    %v294 = vld [vmem:[#allocation2 + $0xa8] sm:$0xff]
    %v295 = vld [vmem:[#allocation2 + $0xb0] sm:$0xff]
    %v296 = vld [vmem:[#allocation2 + $0xb8] sm:$0xff]
    %v297 = vld [vmem:[#allocation2 + $0xc0] sm:$0xff]
    %v298 = vld [vmem:[#allocation2 + $0xc8] sm:$0xff]
    %v299 = vld [vmem:[#allocation2 + $0xd0] sm:$0xff]
    %v300 = vld [vmem:[#allocation2 + $0xd8] sm:$0xff]
    %v301 = vld [vmem:[#allocation2 + $0xe0] sm:$0xff]
    %v302 = vld [vmem:[#allocation2 + $0xe8] sm:$0xff]
    %v303 = vld [vmem:[#allocation2 + $0xf0] sm:$0xff]
    %v304 = vld [vmem:[#allocation2 + $0xf8] sm:$0xff]
    %v305 = vld [vmem:[%s3] sm:$0x1]
    %v307 = vlaneseq
    %v308 = vshrl.u32 %v307, 7
    %v309 = vsub.s32 0, %v308
    %v310 = vrot.slane %v305, %v309
    %312 = vmatprep.subr.mxu0 0.0
    %313 = vmatpush1.msra.mxu0 %v273
    %314 = vmatprep.subr.mxu0 0.0
    %315 = vmatpush1.msra.mxu0 %v274
    %316 = vmatprep.subr.mxu0 0.0
    %317 = vmatpush1.msra.mxu0 %v275
    %318 = vmatprep.subr.mxu0 0.0
    %319 = vmatpush1.msra.mxu0 %v276
    %320 = vmatprep.subr.mxu0 0.0
    %321 = vmatpush1.msra.mxu0 %v277
    %322 = vmatprep.subr.mxu0 0.0
    %323 = vmatpush1.msra.mxu0 %v278
    %324 = vmatprep.subr.mxu0 0.0
    %325 = vmatpush1.msra.mxu0 %v279
    %326 = vmatprep.subr.mxu0 0.0
    %327 = vmatpush1.msra.mxu0 %v280
    %328 = vmatprep.subr.mxu0 0.0
    %329 = vmatpush1.msra.mxu0 %v281
    %330 = vmatprep.subr.mxu0 0.0
    %331 = vmatpush1.msra.mxu0 %v282
    %332 = vmatprep.subr.mxu0 0.0
    %333 = vmatpush1.msra.mxu0 %v283
    %334 = vmatprep.subr.mxu0 0.0
    %335 = vmatpush1.msra.mxu0 %v284
    %336 = vmatprep.subr.mxu0 0.0
    %337 = vmatpush1.msra.mxu0 %v285
    %338 = vmatprep.subr.mxu0 0.0
    %339 = vmatpush1.msra.mxu0 %v286
    %340 = vmatprep.subr.mxu0 0.0
    %341 = vmatpush1.msra.mxu0 %v287
    %342 = vmatprep.subr.mxu0 0.0
    %343 = vmatpush1.msra.mxu0 %v288
    %344 = vmatprep.subr.mxu0 0.0
    %345 = vmatpush1.msra.mxu0 %v289
    %346 = vmatprep.subr.mxu0 0.0
    %347 = vmatpush1.msra.mxu0 %v290
    %348 = vmatprep.subr.mxu0 0.0
    %349 = vmatpush1.msra.mxu0 %v291
    %350 = vmatprep.subr.mxu0 0.0
    %351 = vmatpush1.msra.mxu0 %v292
    %352 = vmatprep.subr.mxu0 0.0
    %353 = vmatpush1.msra.mxu0 %v293
    %354 = vmatprep.subr.mxu0 0.0
    %355 = vmatpush1.msra.mxu0 %v294
    %356 = vmatprep.subr.mxu0 0.0
    %357 = vmatpush1.msra.mxu0 %v295
    %358 = vmatprep.subr.mxu0 0.0
    %359 = vmatpush1.msra.mxu0 %v296
    %360 = vmatprep.subr.mxu0 0.0
    %361 = vmatpush1.msra.mxu0 %v297
    %362 = vmatprep.subr.mxu0 0.0
    %363 = vmatpush1.msra.mxu0 %v298
    %364 = vmatprep.subr.mxu0 0.0
    %365 = vmatpush1.msra.mxu0 %v299
    %366 = vmatprep.subr.mxu0 0.0
    %367 = vmatpush1.msra.mxu0 %v300
    %368 = vmatprep.subr.mxu0 0.0
    %369 = vmatpush1.msra.mxu0 %v301
    %370 = vmatprep.subr.mxu0 0.0
    %371 = vmatpush1.msra.mxu0 %v302
    %372 = vmatprep.subr.mxu0 0.0
    %373 = vmatpush1.msra.mxu0 %v303
    %374 = vmatprep.subr.mxu0 0.0
    %375 = vmatpush1.msra.mxu0 %v304
    %376 = vmatprep.mubr.f32.mxu0 %v272
    %377 = vmatmul.mubr.f32.gmra.mrb[0].mxu0 %v168
    %v378 = vpop.f32.mrb[0].mxu0
    %v379 = vadd.f32 %v310, %v378
    %v380 = vpop.f32.mrb[0].mxu0
    %381 = vdwg.mxu0
    %v382 = vxor.u32 %v379, 2147483648
    %v383 = vmul.f32 %v382, 1.442695
    %v384 = vpow.pop %v383
    %v385 = vadd.f32 %v384, 1.0
    %v386 = vrcp.pop %v385
    %v387 = vmul.f32 1.0, %v386
    %v388 = vmul.f32 %v379, %v387
    %v389 = vld [vmem:[#allocation5] sm:$0xff]
    %v390 = vld [vmem:[#allocation5 + $0x8] sm:$0xff]
    %v391 = vld [vmem:[#allocation5 + $0x10] sm:$0xff]
    %v392 = vld [vmem:[#allocation5 + $0x18] sm:$0xff]
    %v393 = vld [vmem:[#allocation5 + $0x20] sm:$0xff]
    %v394 = vld [vmem:[#allocation5 + $0x28] sm:$0xff]
    %v395 = vld [vmem:[#allocation5 + $0x30] sm:$0xff]
    %v396 = vld [vmem:[#allocation5 + $0x38] sm:$0xff]
    %v397 = vld [vmem:[#allocation5 + $0x40] sm:$0xff]
    %v398 = vld [vmem:[#allocation5 + $0x48] sm:$0xff]
    %v399 = vld [vmem:[#allocation5 + $0x50] sm:$0xff]
    %v400 = vld [vmem:[#allocation5 + $0x58] sm:$0xff]
    %v401 = vld [vmem:[#allocation5 + $0x60] sm:$0xff]
    %v402 = vld [vmem:[#allocation5 + $0x68] sm:$0xff]
    %v403 = vld [vmem:[#allocation5 + $0x70] sm:$0xff]
    %v404 = vld [vmem:[#allocation5 + $0x78] sm:$0xff]
    %v405 = vld [vmem:[%s5] sm:$0x1]
    %v407 = vlaneseq
    %v408 = vshrl.u32 %v407, 7
    %v409 = vsub.s32 0, %v408
    %v410 = vrot.slane %v405, %v409
    %412 = vmatprep.subr.mxu0 0.0
    %413 = vmatpush1.msra.mxu0 %v389
    %414 = vmatprep.subr.mxu0 0.0
    %415 = vmatpush1.msra.mxu0 %v390
    %416 = vmatprep.subr.mxu0 0.0
    %417 = vmatpush1.msra.mxu0 %v391
    %418 = vmatprep.subr.mxu0 0.0
    %419 = vmatpush1.msra.mxu0 %v392
    %420 = vmatprep.subr.mxu0 0.0
    %421 = vmatpush1.msra.mxu0 %v393
    %422 = vmatprep.subr.mxu0 0.0
    %423 = vmatpush1.msra.mxu0 %v394
    %424 = vmatprep.subr.mxu0 0.0
    %425 = vmatpush1.msra.mxu0 %v395
    %426 = vmatprep.subr.mxu0 0.0
    %427 = vmatpush1.msra.mxu0 %v396
    %428 = vmatprep.subr.mxu0 0.0
    %429 = vmatpush1.msra.mxu0 %v397
    %430 = vmatprep.subr.mxu0 0.0
    %431 = vmatpush1.msra.mxu0 %v398
    %432 = vmatprep.subr.mxu0 0.0
    %433 = vmatpush1.msra.mxu0 %v399
    %434 = vmatprep.subr.mxu0 0.0
    %435 = vmatpush1.msra.mxu0 %v400
    %436 = vmatprep.subr.mxu0 0.0
    %437 = vmatpush1.msra.mxu0 %v401
    %438 = vmatprep.subr.mxu0 0.0
    %439 = vmatpush1.msra.mxu0 %v402
    %440 = vmatprep.subr.mxu0 0.0
    %441 = vmatpush1.msra.mxu0 %v403
    %442 = vmatprep.subr.mxu0 0.0
    %443 = vmatpush1.msra.mxu0 %v404
    %444 = vmatprep.subr.mxu0 0.0
    %445 = vmatpush1.msra.mxu0 0.0
    %446 = vmatprep.subr.mxu0 0.0
    %447 = vmatpush1.msra.mxu0 0.0
    %448 = vmatprep.subr.mxu0 0.0
    %449 = vmatpush1.msra.mxu0 0.0
    %450 = vmatprep.subr.mxu0 0.0
    %451 = vmatpush1.msra.mxu0 0.0
    %452 = vmatprep.subr.mxu0 0.0
    %453 = vmatpush1.msra.mxu0 0.0
    %454 = vmatprep.subr.mxu0 0.0
    %455 = vmatpush1.msra.mxu0 0.0
    %456 = vmatprep.subr.mxu0 0.0
    %457 = vmatpush1.msra.mxu0 0.0
    %458 = vmatprep.subr.mxu0 0.0
    %459 = vmatpush1.msra.mxu0 0.0
    %460 = vmatprep.subr.mxu0 0.0
    %461 = vmatpush1.msra.mxu0 0.0
    %462 = vmatprep.subr.mxu0 0.0
    %463 = vmatpush1.msra.mxu0 0.0
    %464 = vmatprep.subr.mxu0 0.0
    %465 = vmatpush1.msra.mxu0 0.0
    %466 = vmatprep.subr.mxu0 0.0
    %467 = vmatpush1.msra.mxu0 0.0
    %468 = vmatprep.subr.mxu0 0.0
    %469 = vmatpush1.msra.mxu0 0.0
    %470 = vmatprep.subr.mxu0 0.0
    %471 = vmatpush1.msra.mxu0 0.0
    %472 = vmatprep.subr.mxu0 0.0
    %473 = vmatpush1.msra.mxu0 0.0
    %474 = vmatprep.subr.mxu0 0.0
    %475 = vmatpush1.msra.mxu0 0.0
    %476 = vmatprep.mubr.f32.mxu0 0.0
    %477 = vmatmul.mubr.f32.gmra.mrb[0].mxu0 %v388
    %v478 = vpop.f32.mrb[0].mxu0
    %v479 = vadd.f32 %v410, %v478
    %v480 = vpop.f32.mrb[0].mxu0
    %481 = vdwg.mxu0
    %482 = vst [vmem:[#allocation7] sm:$0xff] %v479
    // Predicated region
    $region34: #{tpu_custom_call.1} parent=1 // pred_check
      _
    $region35: #{tpu_custom_call.1} parent=1 // pred_check_branch
      %484 = sbr.rel (0) target = $region37
    $region36: #{tpu_custom_call.1} parent=1 // pred_region
      %s486 = ssub.s32 128, 128
      %487 = vsyncadd [#allocation4], %s486
      %s489 = sshll.u32 [#allocation7], 4
      %s490 = int_to_ptr.vmem [resolvable:$true] %s489
      %492 = dma.vmem_to_hbm [thread:$0]  %s490, 128, %s6, [#allocation4]
    $region37: #{tpu_custom_call.1} parent=1 // pred_fallthru
      _
    // Predicated region
    $region38: #{tpu_custom_call.1} parent=1 // pred_check
      _
    $region39: #{tpu_custom_call.1} parent=1 // pred_check_branch
      %494 = sbr.rel (0) target = $region41
    $region40: #{tpu_custom_call.1} parent=1 // pred_region
      %495 = dma.done [#allocation4], 128
    $region41: #{tpu_custom_call.1} parent=1 // pred_fallthru
      _
    %496 = vsyncpa [#allocation3], 1
    %497 = vsyncpa [#allocation6], 1
    %498 = vsyncpa [#allocation4], 1

</llo_original>
